<compile_context>
chip_gen: v5e
topology: v5e:2x2
jax: 0.10.0
libtpu: 0.0.40
codegen_flags: <defaults>
</compile_context>

<pallas_src>
import math
from typing import NamedTuple, Optional

import jax
import jax.numpy as jnp
from jax.experimental import pallas as pl
from jax.experimental.pallas import tpu as pltpu

LANE = 128
SUBLANE = 16  # bf16 sublane packing


def _round_up(n, m):
    return ((n + m - 1) // m) * m


def _cdiv(a, b):
    return -(-a // b)


def _vmem_capacity_bytes():
    try:
        cap = int(pltpu.get_tpu_info().vmem_capacity_bytes)
        if cap > 0:
            return cap
    except Exception:
        pass
    return 64 * 1024 * 1024  # conservative: v7x per-TensorCore VMEM


def _pad2(a, shape, dtype):
    a = a.astype(dtype)
    if tuple(a.shape) == tuple(shape):
        return a
    return jnp.zeros(shape, dtype).at[: a.shape[0], : a.shape[1]].set(a)


# ----------------------------------------------------------------------------
# Kernels
# ----------------------------------------------------------------------------
def _qmlp_fused_kernel(x_ref, w1_ref, b1_ref, w2_ref, b2_ref, o_ref):
    """Both matmuls in one shot; weights are fully VMEM-resident for this call."""
    h = jnp.dot(x_ref[...], w1_ref[...], preferred_element_type=jnp.float32)
    h = jnp.maximum(h + b1_ref[...], 0.0)            # b1 is (1, H*): broadcasts over rows
    out = jnp.dot(h.astype(w2_ref.dtype), w2_ref[...],
                  preferred_element_type=jnp.float32)
    o_ref[...] = (out + b2_ref[...]).astype(o_ref.dtype)


def _qmlp_ktiled_kernel(x_ref, w1_ref, b1_ref, w2_ref, b2_ref, o_ref, acc_ref):
    """Hidden dim (N of matmul-1 / K of matmul-2) tiled; f32 accumulator in scratch."""
    k = pl.program_id(1)

    @pl.when(k == 0)
    def _init():
        acc_ref[...] = jnp.zeros_like(acc_ref)

    h = jnp.dot(x_ref[...], w1_ref[...], preferred_element_type=jnp.float32)
    h = jnp.maximum(h + b1_ref[...], 0.0)             # per-hidden-chunk bias slice
    acc_ref[...] += jnp.dot(h.astype(w2_ref.dtype), w2_ref[...],
                            preferred_element_type=jnp.float32)

    @pl.when(k == pl.num_programs(1) - 1)
    def _finalize():
        o_ref[...] = (acc_ref[...] + b2_ref[...]).astype(o_ref.dtype)


# ----------------------------------------------------------------------------
# Parameter preparation (hoisted padding / casting -- do this once)
# ----------------------------------------------------------------------------
class QMLPParams(NamedTuple):
    w1p: jax.Array            # (Ep, Hp) bf16, zero padded
    b1p: jax.Array            # (1, Hp)  f32
    w2p: jax.Array            # (Hp, Hp) bf16
    b2p: jax.Array            # (1, Hp)  f32
    w1s: Optional[jax.Array]  # unpadded f32 copies for the tiny-shape path
    b1s: Optional[jax.Array]
    w2s: Optional[jax.Array]
    b2s: Optional[jax.Array]
    E: int
    H: int


def prepare_qmlp_params(w1, b1, w2, b2):
    """Pad + cast once (keeps the per-call HBM pad/cast traffic out of forward).

    w1: (E, H), b1: (H,), w2: (H, H), b2: (H,)  -- (in, out) layout.
    Zero padding is numerically inert: padded x columns meet zero W1 rows, padded
    hidden columns have zero bias (ReLU(0)=0) and meet zero W2 rows, padded output
    columns are sliced off.
    """
    E, H = w1.shape
    Ep, Hp = _round_up(E, LANE), _round_up(H, LANE)
    w1p = _pad2(w1, (Ep, Hp), jnp.bfloat16)
    w2p = _pad2(w2, (Hp, Hp), jnp.bfloat16)
    b1p = _pad2(b1.reshape(1, -1), (1, Hp), jnp.float32)
    b2p = _pad2(b2.reshape(1, -1), (1, Hp), jnp.float32)

    small = (E <= LANE) and (H <= LANE)
    w1s = w1.astype(jnp.float32) if small else None
    b1s = b1.reshape(1, -1).astype(jnp.float32) if small else None
    w2s = w2.astype(jnp.float32) if small else None
    b2s = b2.reshape(1, -1).astype(jnp.float32) if small else None
    return QMLPParams(w1p, b1p, w2p, b2p, w1s, b1s, w2s, b2s, E, H)


# ----------------------------------------------------------------------------
# Forward
# ----------------------------------------------------------------------------
def qmlp_forward(x, params: QMLPParams, *, batch_tile=256, hidden_tile=None,
                 out_dtype=jnp.float32):
    """x: (B, E) f32. Returns (B, H) in out_dtype (f32 default; bf16 supported)."""
    B, E = x.shape
    assert E == params.E, f"expected x with {params.E} features, got {E}"
    H = params.H
    Ep, Hp = params.w1p.shape

    # ---- tiny-shape escape hatch: no padding, single un-gridded full-block call.
    if params.w1s is not None and B <= 1024:
        return pl.pallas_call(
            _qmlp_fused_kernel,
            out_shape=jax.ShapeDtypeStruct((B, H), out_dtype),
        )(x.astype(jnp.float32), params.w1s, params.b1s, params.w2s, params.b2s)

    # ---- batch tiling: hug B, and give the two v7x TensorCores >= 2 tiles.
    nb = max(1, _cdiv(B, batch_tile))
    if nb == 1 and B >= 256:
        nb = 2
    TB = _round_up(_cdiv(B, nb), SUBLANE)
    Bp = _round_up(B, TB)
    nb = Bp // TB

    out_bytes = jnp.dtype(out_dtype).itemsize

    # ---- chip-aware VMEM budget and hidden-dim tile selection.
    vmem_cap = _vmem_capacity_bytes()
    vmem_budget = max(vmem_cap - 16 * 1024 * 1024, 24 * 1024 * 1024)

    def footprint(tk, resident):
        wbuf = 1 if resident else 2                       # Buffered(1) when resident
        return (2 * TB * Ep * 2                           # x tiles (bf16, double-buffered)
                + wbuf * (Ep * tk * 2 + tk * Hp * 2 + tk * 4)   # W1 / W2 / b1 blocks
                + Hp * 4                                  # b2 (resident, single buffer)
                + 2 * TB * Hp * out_bytes                 # out tiles
                + (0 if resident else TB * Hp * 4))       # f32 accumulator scratch

    if hidden_tile is not None:
        TK = min(_round_up(hidden_tile, LANE), Hp)
        while Hp % TK:                                    # TK must divide Hp exactly
            TK += LANE
    elif footprint(Hp, True) <= vmem_budget:
        TK = Hp                                           # fully weight-resident
    else:
        cands = [c for c in range(Hp - LANE, 0, -LANE) if Hp % c == 0]
        TK = next((c for c in cands if footprint(c, False) <= vmem_budget), LANE)

    resident = (TK == Hp)
    nk = Hp // TK

    need = footprint(TK, resident)
    vmem_limit = int(min(max(need + need // 4, 24 * 1024 * 1024),
                         vmem_cap - 8 * 1024 * 1024))

    # ---- activations: cast to bf16; pad only if actually required.
    x_b = x.astype(jnp.bfloat16)
    if (Bp, Ep) != (B, E):
        x_b = jnp.zeros((Bp, Ep), jnp.bfloat16).at[:B, :E].set(x_b)

    w_bytes = (params.w1p.size + params.w2p.size) * 2 + (params.b1p.size + params.b2p.size) * 4
    cost = pl.CostEstimate(
        flops=2 * Bp * Hp * (Ep + Hp),
        transcendentals=0,
        bytes_accessed=int(Bp * Ep * 2
                           + (w_bytes if resident else nb * w_bytes)
                           + Bp * Hp * out_bytes),
    )

    def _build(use_single_buffer):
        def res_spec(shape, imap):
            # Constant block index across the grid -> one VMEM buffer is enough.
            if use_single_buffer:
                return pl.BlockSpec(shape, imap, pipeline_mode=pl.Buffered(1))
            return pl.BlockSpec(shape, imap)

        if resident:
            grid = (nb,)
            in_specs = [
                pl.BlockSpec((TB, Ep), lambda i: (i, 0)),     # x: pipelined over batch
                res_spec((Ep, Hp), lambda i: (0, 0)),         # W1: resident
                res_spec((1, Hp), lambda i: (0, 0)),          # b1: resident
                res_spec((Hp, Hp), lambda i: (0, 0)),         # W2: resident
                res_spec((1, Hp), lambda i: (0, 0)),          # b2: resident
            ]
            out_specs = pl.BlockSpec((TB, Hp), lambda i: (i, 0))
            scratch = []
            sem = ("parallel",)
            kernel = _qmlp_fused_kernel
        else:
            grid = (nb, nk)
            in_specs = [
                pl.BlockSpec((TB, Ep), lambda i, k: (i, 0)),  # x: constant over k
                pl.BlockSpec((Ep, TK), lambda i, k: (0, k)),  # W1 hidden chunk
                pl.BlockSpec((1, TK), lambda i, k: (0, k)),   # b1 hidden chunk
                pl.BlockSpec((TK, Hp), lambda i, k: (k, 0)),  # W2 hidden chunk
                res_spec((1, Hp), lambda i, k: (0, 0)),       # b2: resident
            ]
            out_specs = pl.BlockSpec((TB, Hp), lambda i, k: (i, 0))
            scratch = [pltpu.VMEM((TB, Hp), jnp.float32)]
            sem = ("parallel", "arbitrary")
            kernel = _qmlp_ktiled_kernel

        return pl.pallas_call(
            kernel,
            out_shape=jax.ShapeDtypeStruct((Bp, Hp), out_dtype),
            grid_spec=pltpu.PrefetchScalarGridSpec(
                num_scalar_prefetch=0,
                grid=grid,
                in_specs=in_specs,
                out_specs=out_specs,
                scratch_shapes=scratch,
            ),
            compiler_params=pltpu.CompilerParams(
                dimension_semantics=sem,
                vmem_limit_bytes=vmem_limit,
            ),
            cost_estimate=cost,
        )

    args = (x_b, params.w1p, params.b1p, params.w2p, params.b2p)
    try:
        out_p = _build(True)(*args)
    except Exception:
        # Fallback if pipeline_mode=pl.Buffered(1) is unsupported by this jax/libtpu.
        out_p = _build(False)(*args)

    return out_p[:B, :H]


# ----------------------------------------------------------------------------
# Init + reference
# ----------------------------------------------------------------------------
def init_qmlp_params(key, emb_hidden_size, q_hidden_size):
    """Deterministic init mirroring the module:
       kaiming_normal_ on weights (std = sqrt(2 / fan_in)), zero biases.
       Weights returned in (in, out) layout (transpose of torch's (out, in))."""
    k1, k2 = jax.random.split(key)
    std1 = math.sqrt(2.0 / emb_hidden_size)
    std2 = math.sqrt(2.0 / q_hidden_size)
    w1 = jax.random.normal(k1, (emb_hidden_size, q_hidden_size), jnp.float32) * std1
    b1 = jnp.zeros((q_hidden_size,), jnp.float32)
    w2 = jax.random.normal(k2, (q_hidden_size, q_hidden_size), jnp.float32) * std2
    b2 = jnp.zeros((q_hidden_size,), jnp.float32)
    return w1, b1, w2, b2


def qmlp_reference_f32(x, w1, b1, w2, b2):
    h = jnp.maximum(x @ w1 + b1, 0.0)
    return h @ w2 + b2


if __name__ == "__main__":
    # NOTE: dropout=0.0 in this configuration (and eval semantics), so no dropout op.
    key = jax.random.PRNGKey(0)
    kx1, kp1, kx2, kp2 = jax.random.split(key, 4)

    # --- Test 1: tiny shapes consistent with the module (exercises the small-shape path).
    batch, emb_hidden_size, q_hidden_size = 8, 32, 32
    x1 = jax.random.normal(kx1, (batch, emb_hidden_size), jnp.float32)
    w1, b1, w2, b2 = init_qmlp_params(kp1, emb_hidden_size, q_hidden_size)
    params1 = prepare_qmlp_params(w1, b1, w2, b2)
    out1 = jax.block_until_ready(qmlp_forward(x1, params1))
    ref1 = qmlp_reference_f32(x1, w1, b1, w2, b2)
    assert out1.shape == (batch, q_hidden_size)
    assert jnp.allclose(out1, ref1, atol=5e-2, rtol=5e-2), "small-path mismatch"

    # --- Test 2: modest shapes exercising the tiled / pipelined main paths.
    B2, E2, H2 = 160, 256, 384
    x2 = jax.random.normal(kx2, (B2, E2), jnp.float32)
    w1b, b1b, w2b, b2b = init_qmlp_params(kp2, E2, H2)
    params2 = prepare_qmlp_params(w1b, b1b, w2b, b2b)
    ref2 = qmlp_reference_f32(x2, w1b, b1b, w2b, b2b)

    # (a) fully weight-resident path (single-buffered weights, batch-parallel grid)
    out2a = jax.block_until_ready(qmlp_forward(x2, params2, batch_tile=64))
    # (b) hidden-dim-tiled accumulator path (forced via hidden_tile)
    out2b = jax.block_until_ready(
        qmlp_forward(x2, params2, batch_tile=64, hidden_tile=128))

    assert out2a.shape == (B2, H2) and out2b.shape == (B2, H2)
    # bf16 matmul inputs (f32 accumulation) -> loose tolerance vs f32 reference.
    assert jnp.allclose(out2a, ref2, atol=1e-1, rtol=1e-1), "resident-path mismatch"
    assert jnp.allclose(out2b, ref2, atol=1e-1, rtol=1e-1), "k-tiled-path mismatch"
    assert jnp.allclose(out2a, out2b, atol=1e-2, rtol=1e-2), "path disagreement"

    print("KERNEL_OK")
</pallas_src>

<mosaic_0001>
module attributes {stable_mosaic.version = 11 : i64} {
  func.func @_qmlp_fused_kernel(%arg0: memref<8x32xf32, #tpu.memory_space<vmem>>, %arg1: memref<32x32xf32, #tpu.memory_space<vmem>>, %arg2: memref<1x32xf32, #tpu.memory_space<vmem>>, %arg3: memref<32x32xf32, #tpu.memory_space<vmem>>, %arg4: memref<1x32xf32, #tpu.memory_space<vmem>>, %arg5: memref<8x32xf32, #tpu.memory_space<vmem>>) attributes {dimension_semantics = [], scalar_prefetch = 0 : i64, scratch_operands = 0 : i64, tpu.core_type = #tpu.core_type<tc>} {
    %c0 = arith.constant 0 : index
    %c0_0 = arith.constant 0 : index
    %0 = vector.load %arg0[%c0, %c0_0] : memref<8x32xf32, #tpu.memory_space<vmem>>, vector<8x32xf32>
    %c0_1 = arith.constant 0 : index
    %c0_2 = arith.constant 0 : index
    %1 = vector.load %arg1[%c0_1, %c0_2] : memref<32x32xf32, #tpu.memory_space<vmem>>, vector<32x32xf32>
    %cst = arith.constant dense<0.000000e+00> : vector<8x32xf32>
    %2 = tpu.matmul %0, %1, %cst {dimension_numbers = #tpu.dot_dimension_numbers<[1], [0], [0], [1], [0, 0, 1, 1], [], []>} : vector<8x32xf32>, vector<32x32xf32>, vector<8x32xf32> -> vector<8x32xf32>
    %c0_3 = arith.constant 0 : index
    %c0_4 = arith.constant 0 : index
    %3 = vector.load %arg2[%c0_3, %c0_4] : memref<1x32xf32, #tpu.memory_space<vmem>>, vector<1x32xf32>
    %4 = vector.broadcast %3 : vector<1x32xf32> to vector<8x32xf32>
    %5 = arith.addf %2, %4 : vector<8x32xf32>
    %cst_5 = arith.constant 0.000000e+00 : f32
    %6 = vector.broadcast %cst_5 : f32 to vector<8x32xf32>
    %7 = arith.maximumf %5, %6 : vector<8x32xf32>
    %c0_6 = arith.constant 0 : index
    %c0_7 = arith.constant 0 : index
    %8 = vector.load %arg3[%c0_6, %c0_7] : memref<32x32xf32, #tpu.memory_space<vmem>>, vector<32x32xf32>
    %cst_8 = arith.constant dense<0.000000e+00> : vector<8x32xf32>
    %9 = tpu.matmul %7, %8, %cst_8 {dimension_numbers = #tpu.dot_dimension_numbers<[1], [0], [0], [1], [0, 0, 1, 1], [], []>} : vector<8x32xf32>, vector<32x32xf32>, vector<8x32xf32> -> vector<8x32xf32>
    %c0_9 = arith.constant 0 : index
    %c0_10 = arith.constant 0 : index
    %10 = vector.load %arg4[%c0_9, %c0_10] : memref<1x32xf32, #tpu.memory_space<vmem>>, vector<1x32xf32>
    %11 = vector.broadcast %10 : vector<1x32xf32> to vector<8x32xf32>
    %12 = arith.addf %9, %11 : vector<8x32xf32>
    %c0_11 = arith.constant 0 : index
    %c0_12 = arith.constant 0 : index
    %13 = vector.load %arg5[%c0_11, %c0_12] : memref<8x32xf32, #tpu.memory_space<vmem>>, vector<8x32xf32>
    tpu.vector_store %arg5[%c0_11, %c0_12], %12 {strides = array<i32>} : memref<8x32xf32, #tpu.memory_space<vmem>>, vector<8x32xf32>,
    return
  }
}

</mosaic_0001>

<llo_original>
// kernel: tpu_custom_call.1
$region0: #{tpu_custom_call.1}
  #allocation0 [shape = 'u32[]', space=smem, size = 0x4, offset = 0x4, fixed_abs, tag = 'smem constant byte address 0x4 - core index']
  #allocation1 [shape = 'u32[72,128]{1,0:T(1,128)}', space=vmem, size = 0x9000, scoped, tag = 'internal scratch']
  %s0 = inlined_call_operand.hbm [shape: f32[8,32], index: 0, kind: input, shape index: {}]
  %s1 = inlined_call_operand.hbm [shape: f32[32,32], index: 1, kind: input, shape index: {}]
  %s2 = inlined_call_operand.vmem [shape: f32[1,32], index: 2, kind: input, shape index: {}]
  %s3 = inlined_call_operand.hbm [shape: f32[32,32], index: 3, kind: input, shape index: {}]
  %s4 = inlined_call_operand.vmem [shape: f32[1,32], index: 4, kind: input, shape index: {}]
  %s5 = inlined_call_operand.hbm [shape: f32[8,32], index: 5, kind: output, shape index: {}]
  %s6 = sld [smem:[#allocation0]]
  $region42: #{tpu_custom_call.1} parent=0
    _
  %s8 = ssub.s32 1, %s6
  %s9 = scalar_select 0, %s8, %s6
  $region1: #{tpu_custom_call.1} parent=0
    #allocation2 [shape = 'u8[4096]{0}', space=vmem, size = 0x1000, scoped, tag = 'input window, operand 0, single buffered']
    #allocation3 [shape = 's32[1]{0}', space=sflag, size = 0x4, scoped, tag = 'scoped memory for tpu_custom_call.1']
    #allocation4 [shape = 's32[1]{0}', space=sflag, size = 0x4, scoped, tag = 'scoped memory for tpu_custom_call.1']
    #allocation5 [shape = 'u8[16384]{0}', space=vmem, size = 0x4000, scoped, tag = 'input window, operand 1, single buffered']
    #allocation6 [shape = 's32[1]{0}', space=sflag, size = 0x4, scoped, tag = 'scoped memory for tpu_custom_call.1']
    #allocation7 [shape = 'u8[16384]{0}', space=vmem, size = 0x4000, scoped, tag = 'input window, operand 3, single buffered']
    #allocation8 [shape = 'u8[4096]{0}', space=vmem, size = 0x1000, scoped, tag = 'output window, operand 0, single buffered']
    %10 = vsyncpa [#allocation3], 0
    %11 = vsyncpa [#allocation6], 0
    %12 = vsyncpa [#allocation4], 0
    // Predicated region
    $region2: #{tpu_custom_call.1} parent=1 // pred_check
      _
    $region3: #{tpu_custom_call.1} parent=1 // pred_check_branch
      %14 = sbr.rel (0) target = $region5
    $region4: #{tpu_custom_call.1} parent=1 // pred_region
      %16 = vsyncadd [#allocation3], 0
      %s18 = sshll.u32 %s0, 4
      %s19 = int_to_ptr.hbm [resolvable:$true] %s18
      %s20 = sshll.u32 [#allocation2], 4
      %s21 = int_to_ptr.vmem [resolvable:$true] %s20
      %23 = dma.hbm_to_vmem [thread:$0]  %s19, 128, %s21, [#allocation3]
    $region5: #{tpu_custom_call.1} parent=1 // pred_fallthru
      _
    // Predicated region
    $region6: #{tpu_custom_call.1} parent=1 // pred_check
      _
    $region7: #{tpu_custom_call.1} parent=1 // pred_check_branch
      %25 = sbr.rel (0) target = $region9
    $region8: #{tpu_custom_call.1} parent=1 // pred_region
      %27 = vsyncadd [#allocation6], 0
      %s28 = sshll.u32 %s1, 4
      %s29 = int_to_ptr.hbm [resolvable:$true] %s28
      %s30 = sshll.u32 [#allocation5], 4
      %s31 = int_to_ptr.vmem [resolvable:$true] %s30
      %36 = dma.hbm_to_vmem [thread:$0]  %s29, 512, %s31, [#allocation6], 128, 128, 8
    $region9: #{tpu_custom_call.1} parent=1 // pred_fallthru
      _
    // Predicated region
    $region10: #{tpu_custom_call.1} parent=1 // pred_check
      _
    $region11: #{tpu_custom_call.1} parent=1 // pred_check_branch
      %38 = sbr.rel (0) target = $region13
    $region12: #{tpu_custom_call.1} parent=1 // pred_region
      _
    $region13: #{tpu_custom_call.1} parent=1 // pred_fallthru
      _
    // Predicated region
    $region14: #{tpu_custom_call.1} parent=1 // pred_check
      _
    $region15: #{tpu_custom_call.1} parent=1 // pred_check_branch
      %40 = sbr.rel (0) target = $region17
    $region16: #{tpu_custom_call.1} parent=1 // pred_region
      %42 = vsyncadd [#allocation6], 0
      %s43 = sshll.u32 %s3, 4
      %s44 = int_to_ptr.hbm [resolvable:$true] %s43
      %s45 = sshll.u32 [#allocation7], 4
      %s46 = int_to_ptr.vmem [resolvable:$true] %s45
      %51 = dma.hbm_to_vmem [thread:$0]  %s44, 512, %s46, [#allocation6], 128, 128, 8
    $region17: #{tpu_custom_call.1} parent=1 // pred_fallthru
      _
    // Predicated region
    $region18: #{tpu_custom_call.1} parent=1 // pred_check
      _
    $region19: #{tpu_custom_call.1} parent=1 // pred_check_branch
      %53 = sbr.rel (0) target = $region21
    $region20: #{tpu_custom_call.1} parent=1 // pred_region
      _
    $region21: #{tpu_custom_call.1} parent=1 // pred_fallthru
      _
    // Predicated region
    $region22: #{tpu_custom_call.1} parent=1 // pred_check
      _
    $region23: #{tpu_custom_call.1} parent=1 // pred_check_branch
      %55 = sbr.rel (0) target = $region25
    $region24: #{tpu_custom_call.1} parent=1 // pred_region
      %57 = dma.done [#allocation3], 128
    $region25: #{tpu_custom_call.1} parent=1 // pred_fallthru
      _
    // Predicated region
    $region26: #{tpu_custom_call.1} parent=1 // pred_check
      _
    $region27: #{tpu_custom_call.1} parent=1 // pred_check_branch
      %59 = sbr.rel (0) target = $region29
    $region28: #{tpu_custom_call.1} parent=1 // pred_region
      %61 = dma.done [#allocation6], 512
    $region29: #{tpu_custom_call.1} parent=1 // pred_fallthru
      _
    // Predicated region
    $region30: #{tpu_custom_call.1} parent=1 // pred_check
      _
    $region31: #{tpu_custom_call.1} parent=1 // pred_check_branch
      %63 = sbr.rel (0) target = $region33
    $region32: #{tpu_custom_call.1} parent=1 // pred_region
      %65 = dma.done [#allocation6], 512
    $region33: #{tpu_custom_call.1} parent=1 // pred_fallthru
      _
    %v66 = vld [vmem:[#allocation2] sm:$0xff]
    %v67 = vld [vmem:[#allocation5] sm:$0xff]
    %v68 = vld [vmem:[#allocation5 + $0x8] sm:$0xff]
    %v69 = vld [vmem:[#allocation5 + $0x10] sm:$0xff]
    %v70 = vld [vmem:[#allocation5 + $0x18] sm:$0xff]
    %v71 = vld [vmem:[%s2] sm:$0x1]
    %v73 = vperm.slane %v71, 0
    %vm75 = vcmask 261120
    %v77 = vsel %vm75, %v66, 0
    %79 = vmatpush.msra.mxu0 0.0
    %80 = vmatpush.msra.mxu0 0.0
    %81 = vmatpush.msra.mxu0 0.0
    %82 = vmatpush.msra.mxu0 0.0
    %83 = vmatpush.msra.mxu0 0.0
    %84 = vmatpush.msra.mxu0 0.0
    %85 = vmatpush.msra.mxu0 0.0
    %86 = vmatpush.msra.mxu0 0.0
    %87 = vmatpush.msra.mxu0 0.0
    %88 = vmatpush.msra.mxu0 0.0
    %89 = vmatpush.msra.mxu0 0.0
    %90 = vmatpush.msra.mxu0 0.0
    %91 = vmatpush.msra.mxu0 %v70
    %92 = vmatpush.msra.mxu0 %v69
    %93 = vmatpush.msra.mxu0 %v68
    %94 = vmatpush.msra.mxu0 %v67
    %95 = vmatmul.f32.gmra.mxu0 %v77
    %v96 = vpop.f32.mrf.mxu0
    %v97 = vadd.f32 %v73, %v96
    %98 = vdwg.mxu0
    %v99 = vmax.f32 %v97, 0.0
    %v100 = vld [vmem:[#allocation7] sm:$0xff]
    %v101 = vld [vmem:[#allocation7 + $0x8] sm:$0xff]
    %v102 = vld [vmem:[#allocation7 + $0x10] sm:$0xff]
    %v103 = vld [vmem:[#allocation7 + $0x18] sm:$0xff]
    %v104 = vld [vmem:[%s4] sm:$0x1]
    %v106 = vperm.slane %v104, 0
    %v109 = vsel %vm75, %v99, 0
    %111 = vmatpush.msra.mxu0 0.0
    %112 = vmatpush.msra.mxu0 0.0
    %113 = vmatpush.msra.mxu0 0.0
    %114 = vmatpush.msra.mxu0 0.0
    %115 = vmatpush.msra.mxu0 0.0
    %116 = vmatpush.msra.mxu0 0.0
    %117 = vmatpush.msra.mxu0 0.0
    %118 = vmatpush.msra.mxu0 0.0
    %119 = vmatpush.msra.mxu0 0.0
    %120 = vmatpush.msra.mxu0 0.0
    %121 = vmatpush.msra.mxu0 0.0
    %122 = vmatpush.msra.mxu0 0.0
    %123 = vmatpush.msra.mxu0 %v103
    %124 = vmatpush.msra.mxu0 %v102
    %125 = vmatpush.msra.mxu0 %v101
    %126 = vmatpush.msra.mxu0 %v100
    %127 = vmatmul.f32.gmra.mxu0 %v109
    %v128 = vpop.f32.mrf.mxu0
    %v129 = vadd.f32 %v106, %v128
    %130 = vdwg.mxu0
    %131 = vst.msk [vmem:[#allocation8] sm:$0xff] %vm75, %v129
    // Predicated region
    $region34: #{tpu_custom_call.1} parent=1 // pred_check
      _
    $region35: #{tpu_custom_call.1} parent=1 // pred_check_branch
      %133 = sbr.rel (0) target = $region37
    $region36: #{tpu_custom_call.1} parent=1 // pred_region
      %135 = vsyncadd [#allocation4], 0
      %s137 = sshll.u32 [#allocation8], 4
      %s138 = int_to_ptr.vmem [resolvable:$true] %s137
      %s139 = sshll.u32 %s5, 4
      %s140 = int_to_ptr.hbm [resolvable:$true] %s139
      %142 = dma.vmem_to_hbm [thread:$0]  %s138, 128, %s140, [#allocation4]
    $region37: #{tpu_custom_call.1} parent=1 // pred_fallthru
      _
    // Predicated region
    $region38: #{tpu_custom_call.1} parent=1 // pred_check
      _
    $region39: #{tpu_custom_call.1} parent=1 // pred_check_branch
      %144 = sbr.rel (0) target = $region41
    $region40: #{tpu_custom_call.1} parent=1 // pred_region
      %146 = dma.done [#allocation4], 128
    $region41: #{tpu_custom_call.1} parent=1 // pred_fallthru
      _
    %147 = vsyncpa [#allocation3], 1
    %148 = vsyncpa [#allocation6], 1
    %149 = vsyncpa [#allocation4], 1

</llo_original>
